<compile_context>
chip_gen: v7x
topology: tpu7x:2x2x1
jax: 0.10.0
libtpu: 0.0.40
codegen_flags: <defaults>
</compile_context>

<pallas_src>
import functools

import jax
import jax.numpy as jnp
from jax import lax
from jax.experimental import pallas as pl
from jax.experimental.pallas import tpu as pltpu


# ----------------------------------------------------------------------------
# The fused per-batch-element kernel
# ----------------------------------------------------------------------------
def xmlcnn_kernel(x_ref, wc_ref, bc_ref, w1_ref, b1_ref, w2_ref, b2_ref, o_ref,
                  *, kernels, num_features):
    # x_ref : (1, L, E)  embedded tokens for this batch element
    # wc_ref: (kmax*E, nb*C)  all conv branches' weights, im2col layout
    # bc_ref: (1, nb*C)       all conv biases
    # w1_ref: (nb*F*C, hidden), b1_ref: (1, hidden)   fc1 (input-perm baked in)
    # w2_ref: (hidden, num_labels), b2_ref: (1, num_labels)
    # o_ref : (1, 1, num_labels)
    nb = len(kernels)
    kmax, kmin = max(kernels), min(kernels)
    L, E = x_ref.shape[1], x_ref.shape[2]
    C = bc_ref.shape[1] // nb

    # Same padding rule as the PyTorch forward: pad time to kmax+1 iff L < kmax.
    l_pad = L if L >= kmax else kmax + 1
    l_out_max = l_pad - kmin + 1
    ext = (l_pad - L) + (kmax - kmin)      # torch pad + im2col tail padding

    x = x_ref[0]                           # (L, E)
    if ext > 0:
        x = jnp.concatenate([x, jnp.zeros((ext, E), x.dtype)], axis=0)

    # im2col over kmax taps -> ONE MXU matmul computes every conv branch.
    x_col = jnp.concatenate([x[dk:dk + l_out_max, :] for dk in range(kmax)],
                            axis=1)                           # (l_out_max, kmax*E)
    conv = jnp.dot(x_col, wc_ref[...], preferred_element_type=jnp.float32)
    conv = jnp.maximum(conv + bc_ref[...], 0.0)               # bias + ReLU

    # AdaptiveMaxPool1d(num_features) per branch over its own valid length,
    # flattened in (branch, bin, channel) order (fc1 weight is pre-permuted).
    pieces = []
    for j, k in enumerate(kernels):
        l_out = l_pad - k + 1
        conv_j = conv[:, j * C:(j + 1) * C]                   # (l_out_max, C)
        for f in range(num_features):
            s = (f * l_out) // num_features
            e = -(-((f + 1) * l_out) // num_features)         # ceil
            pieces.append(jnp.max(conv_j[s:e, :], axis=0, keepdims=True))
    feats = jnp.concatenate(pieces, axis=1)                   # (1, nb*F*C)

    # fc1 + ReLU (dropout = identity), then classifier.
    h = jnp.maximum(
        jnp.dot(feats, w1_ref[...], preferred_element_type=jnp.float32)
        + b1_ref[...], 0.0)
    y = jnp.dot(h, w2_ref[...], preferred_element_type=jnp.float32) + b2_ref[...]
    o_ref[0] = y.astype(o_ref.dtype)


def xmlcnn_fused(emb, conv_w, conv_b, fc1_w, fc1_b, cls_w, cls_b,
                 *, kernels, num_features):
    B, L, E = emb.shape
    num_labels = cls_w.shape[1]
    kern = functools.partial(xmlcnn_kernel, kernels=tuple(kernels),
                             num_features=num_features)
    out = pl.pallas_call(
        kern,
        out_shape=jax.ShapeDtypeStruct((B, 1, num_labels), jnp.float32),
        grid=(B,),
        in_specs=[
            pl.BlockSpec((1, L, E), lambda b: (b, 0, 0)),
            pl.BlockSpec(conv_w.shape, lambda b: (0, 0)),
            pl.BlockSpec(conv_b.shape, lambda b: (0, 0)),
            pl.BlockSpec(fc1_w.shape, lambda b: (0, 0)),
            pl.BlockSpec(fc1_b.shape, lambda b: (0, 0)),
            pl.BlockSpec(cls_w.shape, lambda b: (0, 0)),
            pl.BlockSpec(cls_b.shape, lambda b: (0, 0)),
        ],
        out_specs=pl.BlockSpec((1, 1, num_labels), lambda b: (b, 0, 0)),
        compiler_params=pltpu.CompilerParams(
            dimension_semantics=("parallel",)),   # uses both TCs on v7x
    )(emb, conv_w, conv_b, fc1_w, fc1_b, cls_w, cls_b)
    return out.reshape(B, num_labels)


# ----------------------------------------------------------------------------
# Parameters: PyTorch-layout init + one-time kernel-layout preparation
# ----------------------------------------------------------------------------
def init_params(key, *, num_labels, vocab_size, embedding_size, num_features,
                hidden_size, kernels, channels):
    E, C = embedding_size, channels
    keys = iter(jax.random.split(key, 4 * len(kernels) + 8))

    def nrm(shape, scale=0.1):
        return (scale * jax.random.normal(next(keys), shape)).astype(jnp.float32)

    din = C * num_features * len(kernels)
    return {
        "emb": nrm((vocab_size, E), 1.0),
        "convs": [(nrm((C, E, k)), nrm((C,))) for k in kernels],   # (out,in,k)
        "fc1_w": nrm((hidden_size, din)),
        "fc1_b": nrm((hidden_size,)),
        "cls_w": nrm((num_labels, hidden_size)),
        "cls_b": nrm((num_labels,)),
    }


def prepare_params(params, *, kernels, num_features, channels, **_):
    """One-time re-layout so forward() does zero weight transposes/reshapes."""
    kmax, nb, C, F = max(kernels), len(kernels), channels, num_features
    hidden = params["fc1_b"].shape[0]
    din = nb * F * C

    w_cols, b_list = [], []
    for (w, b), k in zip(params["convs"], kernels):
        w_kec = jnp.transpose(w, (2, 1, 0))                       # (k, E, C)
        w_kec = jnp.pad(w_kec, ((0, kmax - k), (0, 0), (0, 0)))   # pad taps to kmax
        w_cols.append(w_kec.reshape(kmax * w_kec.shape[1], C))    # (kmax*E, C)
        b_list.append(b)

    # torch flattens pooled features as (C, branch, F); kernel produces
    # (branch, F, C) -> permute fc1's input dimension once, here.
    fc1_w_prep = (params["fc1_w"].T                                # (din, hidden)
                  .reshape(C, nb, F, hidden)
                  .transpose(1, 2, 0, 3)
                  .reshape(din, hidden))

    prep = {
        "emb": params["emb"],
        "conv_w": jnp.concatenate(w_cols, axis=1),                 # (kmax*E, nb*C)
        "conv_b": jnp.concatenate(b_list, axis=0).reshape(1, nb * C),
        "fc1_w": fc1_w_prep,
        "fc1_b": params["fc1_b"].reshape(1, -1),
        "cls_w": params["cls_w"].T,                                # (hidden, labels)
        "cls_b": params["cls_b"].reshape(1, -1),
    }
    return jax.tree_util.tree_map(lambda a: a.astype(jnp.float32), prep)


def forward(prep, x_ids, *, kernels, num_features):
    # Embedding lookup (gather) stays in XLA; dropout = identity at inference.
    emb = jnp.take(prep["emb"], x_ids, axis=0)            # (B, L, E)
    return xmlcnn_fused(emb, prep["conv_w"], prep["conv_b"],
                        prep["fc1_w"], prep["fc1_b"],
                        prep["cls_w"], prep["cls_b"],
                        kernels=kernels, num_features=num_features)


# ----------------------------------------------------------------------------
# Pure-JAX reference (mirrors the PyTorch forward) for a runtime sanity check
# ----------------------------------------------------------------------------
def forward_reference(params, x_ids, *, kernels, num_features, **_):
    HI = lax.Precision.HIGHEST
    emb = jnp.take(params["emb"], x_ids, axis=0)          # (B, L, E)
    x = jnp.transpose(emb, (0, 2, 1))                     # (B, E, L)
    kmax = max(kernels)
    if x.shape[-1] < kmax:
        x = jnp.pad(x, ((0, 0), (0, 0), (0, kmax - x.shape[-1] + 1)))
    feats = []
    for (w, b), k in zip(params["convs"], kernels):
        l_out = x.shape[-1] - k + 1
        out = jnp.zeros((x.shape[0], w.shape[0], l_out), jnp.float32)
        for dk in range(k):
            out = out + jnp.einsum("bel,ce->bcl", x[:, :, dk:dk + l_out],
                                   w[:, :, dk], precision=HI)
        out = jnp.maximum(out + b[None, :, None], 0.0)
        pooled = []
        for f in range(num_features):
            s = (f * l_out) // num_features
            e = -(-((f + 1) * l_out) // num_features)
            pooled.append(jnp.max(out[:, :, s:e], axis=-1, keepdims=True))
        feats.append(jnp.concatenate(pooled, axis=-1))    # (B, C, F)
    feats = jnp.concatenate(feats, axis=2).reshape(x.shape[0], -1)
    h = jnp.maximum(jnp.dot(feats, params["fc1_w"].T, precision=HI)
                    + params["fc1_b"], 0.0)
    return jnp.dot(h, params["cls_w"].T, precision=HI) + params["cls_b"]


if __name__ == "__main__":
    cfg = dict(num_labels=8, vocab_size=50, embedding_size=32, num_features=8,
               hidden_size=32, kernels=(3, 5, 9), channels=16)
    B, L = 2, 16

    pkey, xkey = jax.random.split(jax.random.PRNGKey(0))
    params = init_params(pkey, **cfg)
    prep = prepare_params(params, **cfg)        # one-time, outside forward

    x_ids = jax.random.randint(xkey, (B, L), 0, cfg["vocab_size"],
                               dtype=jnp.int32)

    fwd = jax.jit(functools.partial(forward, kernels=cfg["kernels"],
                                    num_features=cfg["num_features"]))
    y = jax.block_until_ready(fwd(prep, x_ids))

    assert y.shape == (B, cfg["num_labels"]) and y.dtype == jnp.float32
    assert bool(jnp.all(jnp.isfinite(y)))

    y_ref = forward_reference(params, x_ids, **cfg)
    assert bool(jnp.allclose(y, y_ref, rtol=5e-2, atol=5e-2)), (y, y_ref)

    print("KERNEL_OK")
</pallas_src>

<mosaic_0001>
module attributes {stable_mosaic.version = 11 : i64} {
  func.func @xmlcnn_kernel(%arg0: i32, %arg1: memref<1x16x32xf32, #tpu.memory_space<vmem>>, %arg2: memref<288x48xf32, #tpu.memory_space<vmem>>, %arg3: memref<1x48xf32, #tpu.memory_space<vmem>>, %arg4: memref<384x32xf32, #tpu.memory_space<vmem>>, %arg5: memref<1x32xf32, #tpu.memory_space<vmem>>, %arg6: memref<32x8xf32, #tpu.memory_space<vmem>>, %arg7: memref<1x8xf32, #tpu.memory_space<vmem>>, %arg8: memref<1x1x8xf32, #tpu.memory_space<vmem>>) attributes {dimension_semantics = [#tpu.dimension_semantics<parallel>], iteration_bounds = array<i64: 2>, scalar_prefetch = 0 : i64, scratch_operands = 0 : i64, tpu.core_type = #tpu.core_type<tc>, window_params = [{transform_indices = @transform_0, window_bounds = array<i64: 1, 16, 32>}, {pipeline_mode = #tpu.pipeline_mode<synchronous>, transform_indices = @transform_1, window_bounds = array<i64: 288, 48>}, {pipeline_mode = #tpu.pipeline_mode<synchronous>, transform_indices = @transform_2, window_bounds = array<i64: 1, 48>}, {pipeline_mode = #tpu.pipeline_mode<synchronous>, transform_indices = @transform_3, window_bounds = array<i64: 384, 32>}, {pipeline_mode = #tpu.pipeline_mode<synchronous>, transform_indices = @transform_4, window_bounds = array<i64: 1, 32>}, {pipeline_mode = #tpu.pipeline_mode<synchronous>, transform_indices = @transform_5, window_bounds = array<i64: 32, 8>}, {pipeline_mode = #tpu.pipeline_mode<synchronous>, transform_indices = @transform_6, window_bounds = array<i64: 1, 8>}, {transform_indices = @transform_7, window_bounds = array<i64: 1, 1, 8>}]} {
    %c0 = arith.constant 0 : index
    %c0_0 = arith.constant 0 : index
    %c0_1 = arith.constant 0 : index
    %0 = vector.load %arg1[%c0, %c0_0, %c0_1] : memref<1x16x32xf32, #tpu.memory_space<vmem>>, vector<1x16x32xf32>
    %1 = vector.shape_cast %0 : vector<1x16x32xf32> to vector<16x32xf32>
    %cst = arith.constant 0.000000e+00 : f32
    %2 = vector.broadcast %cst : f32 to vector<6x32xf32>
    %3 = tpu.concatenate %1, %2 in 0 : vector<16x32xf32>, vector<6x32xf32> -> vector<22x32xf32>
    %4 = vector.extract_strided_slice %3 {offsets = [0, 0], sizes = [14, 32], strides = [1, 1]} : vector<22x32xf32> to vector<14x32xf32>
    %5 = vector.extract_strided_slice %3 {offsets = [1, 0], sizes = [14, 32], strides = [1, 1]} : vector<22x32xf32> to vector<14x32xf32>
    %6 = vector.extract_strided_slice %3 {offsets = [2, 0], sizes = [14, 32], strides = [1, 1]} : vector<22x32xf32> to vector<14x32xf32>
    %7 = vector.extract_strided_slice %3 {offsets = [3, 0], sizes = [14, 32], strides = [1, 1]} : vector<22x32xf32> to vector<14x32xf32>
    %8 = vector.extract_strided_slice %3 {offsets = [4, 0], sizes = [14, 32], strides = [1, 1]} : vector<22x32xf32> to vector<14x32xf32>
    %9 = vector.extract_strided_slice %3 {offsets = [5, 0], sizes = [14, 32], strides = [1, 1]} : vector<22x32xf32> to vector<14x32xf32>
    %10 = vector.extract_strided_slice %3 {offsets = [6, 0], sizes = [14, 32], strides = [1, 1]} : vector<22x32xf32> to vector<14x32xf32>
    %11 = vector.extract_strided_slice %3 {offsets = [7, 0], sizes = [14, 32], strides = [1, 1]} : vector<22x32xf32> to vector<14x32xf32>
    %12 = vector.extract_strided_slice %3 {offsets = [8, 0], sizes = [14, 32], strides = [1, 1]} : vector<22x32xf32> to vector<14x32xf32>
    %13 = tpu.concatenate %4, %5, %6, %7, %8, %9, %10, %11, %12 in 1 : vector<14x32xf32>, vector<14x32xf32>, vector<14x32xf32>, vector<14x32xf32>, vector<14x32xf32>, vector<14x32xf32>, vector<14x32xf32>, vector<14x32xf32>, vector<14x32xf32> -> vector<14x288xf32>
    %c0_2 = arith.constant 0 : index
    %c0_3 = arith.constant 0 : index
    %14 = vector.load %arg2[%c0_2, %c0_3] : memref<288x48xf32, #tpu.memory_space<vmem>>, vector<288x48xf32>
    %cst_4 = arith.constant dense<0.000000e+00> : vector<14x48xf32>
    %15 = tpu.matmul %13, %14, %cst_4 {dimension_numbers = #tpu.dot_dimension_numbers<[1], [0], [0], [1], [0, 0, 1, 1], [], []>} : vector<14x288xf32>, vector<288x48xf32>, vector<14x48xf32> -> vector<14x48xf32>
    %c0_5 = arith.constant 0 : index
    %c0_6 = arith.constant 0 : index
    %16 = vector.load %arg3[%c0_5, %c0_6] : memref<1x48xf32, #tpu.memory_space<vmem>>, vector<1x48xf32>
    %17 = vector.broadcast %16 : vector<1x48xf32> to vector<14x48xf32>
    %18 = arith.addf %15, %17 : vector<14x48xf32>
    %cst_7 = arith.constant 0.000000e+00 : f32
    %19 = vector.broadcast %cst_7 : f32 to vector<14x48xf32>
    %20 = arith.maximumf %18, %19 : vector<14x48xf32>
    %21 = vector.extract_strided_slice %20 {offsets = [0, 0], sizes = [14, 16], strides = [1, 1]} : vector<14x48xf32> to vector<14x16xf32>
    %22 = vector.extract_strided_slice %21 {offsets = [0, 0], sizes = [2, 16], strides = [1, 1]} : vector<14x16xf32> to vector<2x16xf32>
    %cst_8 = arith.constant dense<0xFF800000> : vector<16xf32>
    %23 = vector.multi_reduction <maximumf>, %22, %cst_8 [0] : vector<2x16xf32> to vector<16xf32>
    %24 = vector.shape_cast %23 : vector<16xf32> to vector<1x16xf32>
    %25 = vector.extract_strided_slice %21 {offsets = [1, 0], sizes = [3, 16], strides = [1, 1]} : vector<14x16xf32> to vector<3x16xf32>
    %cst_9 = arith.constant dense<0xFF800000> : vector<16xf32>
    %26 = vector.multi_reduction <maximumf>, %25, %cst_9 [0] : vector<3x16xf32> to vector<16xf32>
    %27 = vector.shape_cast %26 : vector<16xf32> to vector<1x16xf32>
    %28 = vector.extract_strided_slice %21 {offsets = [3, 0], sizes = [3, 16], strides = [1, 1]} : vector<14x16xf32> to vector<3x16xf32>
    %cst_10 = arith.constant dense<0xFF800000> : vector<16xf32>
    %29 = vector.multi_reduction <maximumf>, %28, %cst_10 [0] : vector<3x16xf32> to vector<16xf32>
    %30 = vector.shape_cast %29 : vector<16xf32> to vector<1x16xf32>
    %31 = vector.extract_strided_slice %21 {offsets = [5, 0], sizes = [2, 16], strides = [1, 1]} : vector<14x16xf32> to vector<2x16xf32>
    %cst_11 = arith.constant dense<0xFF800000> : vector<16xf32>
    %32 = vector.multi_reduction <maximumf>, %31, %cst_11 [0] : vector<2x16xf32> to vector<16xf32>
    %33 = vector.shape_cast %32 : vector<16xf32> to vector<1x16xf32>
    %34 = vector.extract_strided_slice %21 {offsets = [7, 0], sizes = [2, 16], strides = [1, 1]} : vector<14x16xf32> to vector<2x16xf32>
    %cst_12 = arith.constant dense<0xFF800000> : vector<16xf32>
    %35 = vector.multi_reduction <maximumf>, %34, %cst_12 [0] : vector<2x16xf32> to vector<16xf32>
    %36 = vector.shape_cast %35 : vector<16xf32> to vector<1x16xf32>
    %37 = vector.extract_strided_slice %21 {offsets = [8, 0], sizes = [3, 16], strides = [1, 1]} : vector<14x16xf32> to vector<3x16xf32>
    %cst_13 = arith.constant dense<0xFF800000> : vector<16xf32>
    %38 = vector.multi_reduction <maximumf>, %37, %cst_13 [0] : vector<3x16xf32> to vector<16xf32>
    %39 = vector.shape_cast %38 : vector<16xf32> to vector<1x16xf32>
    %40 = vector.extract_strided_slice %21 {offsets = [10, 0], sizes = [3, 16], strides = [1, 1]} : vector<14x16xf32> to vector<3x16xf32>
    %cst_14 = arith.constant dense<0xFF800000> : vector<16xf32>
    %41 = vector.multi_reduction <maximumf>, %40, %cst_14 [0] : vector<3x16xf32> to vector<16xf32>
    %42 = vector.shape_cast %41 : vector<16xf32> to vector<1x16xf32>
    %43 = vector.extract_strided_slice %21 {offsets = [12, 0], sizes = [2, 16], strides = [1, 1]} : vector<14x16xf32> to vector<2x16xf32>
    %cst_15 = arith.constant dense<0xFF800000> : vector<16xf32>
    %44 = vector.multi_reduction <maximumf>, %43, %cst_15 [0] : vector<2x16xf32> to vector<16xf32>
    %45 = vector.shape_cast %44 : vector<16xf32> to vector<1x16xf32>
    %46 = vector.extract_strided_slice %20 {offsets = [0, 16], sizes = [14, 16], strides = [1, 1]} : vector<14x48xf32> to vector<14x16xf32>
    %47 = vector.extract_strided_slice %46 {offsets = [0, 0], sizes = [2, 16], strides = [1, 1]} : vector<14x16xf32> to vector<2x16xf32>
    %cst_16 = arith.constant dense<0xFF800000> : vector<16xf32>
    %48 = vector.multi_reduction <maximumf>, %47, %cst_16 [0] : vector<2x16xf32> to vector<16xf32>
    %49 = vector.shape_cast %48 : vector<16xf32> to vector<1x16xf32>
    %50 = vector.extract_strided_slice %46 {offsets = [1, 0], sizes = [2, 16], strides = [1, 1]} : vector<14x16xf32> to vector<2x16xf32>
    %cst_17 = arith.constant dense<0xFF800000> : vector<16xf32>
    %51 = vector.multi_reduction <maximumf>, %50, %cst_17 [0] : vector<2x16xf32> to vector<16xf32>
    %52 = vector.shape_cast %51 : vector<16xf32> to vector<1x16xf32>
    %53 = vector.extract_strided_slice %46 {offsets = [3, 0], sizes = [2, 16], strides = [1, 1]} : vector<14x16xf32> to vector<2x16xf32>
    %cst_18 = arith.constant dense<0xFF800000> : vector<16xf32>
    %54 = vector.multi_reduction <maximumf>, %53, %cst_18 [0] : vector<2x16xf32> to vector<16xf32>
    %55 = vector.shape_cast %54 : vector<16xf32> to vector<1x16xf32>
    %56 = vector.extract_strided_slice %46 {offsets = [4, 0], sizes = [2, 16], strides = [1, 1]} : vector<14x16xf32> to vector<2x16xf32>
    %cst_19 = arith.constant dense<0xFF800000> : vector<16xf32>
    %57 = vector.multi_reduction <maximumf>, %56, %cst_19 [0] : vector<2x16xf32> to vector<16xf32>
    %58 = vector.shape_cast %57 : vector<16xf32> to vector<1x16xf32>
    %59 = vector.extract_strided_slice %46 {offsets = [6, 0], sizes = [2, 16], strides = [1, 1]} : vector<14x16xf32> to vector<2x16xf32>
    %cst_20 = arith.constant dense<0xFF800000> : vector<16xf32>
    %60 = vector.multi_reduction <maximumf>, %59, %cst_20 [0] : vector<2x16xf32> to vector<16xf32>
    %61 = vector.shape_cast %60 : vector<16xf32> to vector<1x16xf32>
    %62 = vector.extract_strided_slice %46 {offsets = [7, 0], sizes = [2, 16], strides = [1, 1]} : vector<14x16xf32> to vector<2x16xf32>
    %cst_21 = arith.constant dense<0xFF800000> : vector<16xf32>
    %63 = vector.multi_reduction <maximumf>, %62, %cst_21 [0] : vector<2x16xf32> to vector<16xf32>
    %64 = vector.shape_cast %63 : vector<16xf32> to vector<1x16xf32>
    %65 = vector.extract_strided_slice %46 {offsets = [9, 0], sizes = [2, 16], strides = [1, 1]} : vector<14x16xf32> to vector<2x16xf32>
    %cst_22 = arith.constant dense<0xFF800000> : vector<16xf32>
    %66 = vector.multi_reduction <maximumf>, %65, %cst_22 [0] : vector<2x16xf32> to vector<16xf32>
    %67 = vector.shape_cast %66 : vector<16xf32> to vector<1x16xf32>
    %68 = vector.extract_strided_slice %46 {offsets = [10, 0], sizes = [2, 16], strides = [1, 1]} : vector<14x16xf32> to vector<2x16xf32>
    %cst_23 = arith.constant dense<0xFF800000> : vector<16xf32>
    %69 = vector.multi_reduction <maximumf>, %68, %cst_23 [0] : vector<2x16xf32> to vector<16xf32>
    %70 = vector.shape_cast %69 : vector<16xf32> to vector<1x16xf32>
    %71 = vector.extract_strided_slice %20 {offsets = [0, 32], sizes = [14, 16], strides = [1, 1]} : vector<14x48xf32> to vector<14x16xf32>
    %72 = vector.extract_strided_slice %71 {offsets = [0, 0], sizes = [1, 16], strides = [1, 1]} : vector<14x16xf32> to vector<1x16xf32>
    %cst_24 = arith.constant dense<0xFF800000> : vector<16xf32>
    %73 = vector.multi_reduction <maximumf>, %72, %cst_24 [0] : vector<1x16xf32> to vector<16xf32>
    %74 = vector.shape_cast %73 : vector<16xf32> to vector<1x16xf32>
    %75 = vector.extract_strided_slice %71 {offsets = [1, 0], sizes = [1, 16], strides = [1, 1]} : vector<14x16xf32> to vector<1x16xf32>
    %cst_25 = arith.constant dense<0xFF800000> : vector<16xf32>
    %76 = vector.multi_reduction <maximumf>, %75, %cst_25 [0] : vector<1x16xf32> to vector<16xf32>
    %77 = vector.shape_cast %76 : vector<16xf32> to vector<1x16xf32>
    %78 = vector.extract_strided_slice %71 {offsets = [2, 0], sizes = [1, 16], strides = [1, 1]} : vector<14x16xf32> to vector<1x16xf32>
    %cst_26 = arith.constant dense<0xFF800000> : vector<16xf32>
    %79 = vector.multi_reduction <maximumf>, %78, %cst_26 [0] : vector<1x16xf32> to vector<16xf32>
    %80 = vector.shape_cast %79 : vector<16xf32> to vector<1x16xf32>
    %81 = vector.extract_strided_slice %71 {offsets = [3, 0], sizes = [1, 16], strides = [1, 1]} : vector<14x16xf32> to vector<1x16xf32>
    %cst_27 = arith.constant dense<0xFF800000> : vector<16xf32>
    %82 = vector.multi_reduction <maximumf>, %81, %cst_27 [0] : vector<1x16xf32> to vector<16xf32>
    %83 = vector.shape_cast %82 : vector<16xf32> to vector<1x16xf32>
    %84 = vector.extract_strided_slice %71 {offsets = [4, 0], sizes = [1, 16], strides = [1, 1]} : vector<14x16xf32> to vector<1x16xf32>
    %cst_28 = arith.constant dense<0xFF800000> : vector<16xf32>
    %85 = vector.multi_reduction <maximumf>, %84, %cst_28 [0] : vector<1x16xf32> to vector<16xf32>
    %86 = vector.shape_cast %85 : vector<16xf32> to vector<1x16xf32>
    %87 = vector.extract_strided_slice %71 {offsets = [5, 0], sizes = [1, 16], strides = [1, 1]} : vector<14x16xf32> to vector<1x16xf32>
    %cst_29 = arith.constant dense<0xFF800000> : vector<16xf32>
    %88 = vector.multi_reduction <maximumf>, %87, %cst_29 [0] : vector<1x16xf32> to vector<16xf32>
    %89 = vector.shape_cast %88 : vector<16xf32> to vector<1x16xf32>
    %90 = vector.extract_strided_slice %71 {offsets = [6, 0], sizes = [1, 16], strides = [1, 1]} : vector<14x16xf32> to vector<1x16xf32>
    %cst_30 = arith.constant dense<0xFF800000> : vector<16xf32>
    %91 = vector.multi_reduction <maximumf>, %90, %cst_30 [0] : vector<1x16xf32> to vector<16xf32>
    %92 = vector.shape_cast %91 : vector<16xf32> to vector<1x16xf32>
    %93 = vector.extract_strided_slice %71 {offsets = [7, 0], sizes = [1, 16], strides = [1, 1]} : vector<14x16xf32> to vector<1x16xf32>
    %cst_31 = arith.constant dense<0xFF800000> : vector<16xf32>
    %94 = vector.multi_reduction <maximumf>, %93, %cst_31 [0] : vector<1x16xf32> to vector<16xf32>
    %95 = vector.shape_cast %94 : vector<16xf32> to vector<1x16xf32>
    %96 = tpu.concatenate %24, %27, %30, %33, %36, %39, %42, %45, %49, %52, %55, %58, %61, %64, %67, %70 in 1 : vector<1x16xf32>, vector<1x16xf32>, vector<1x16xf32>, vector<1x16xf32>, vector<1x16xf32>, vector<1x16xf32>, vector<1x16xf32>, vector<1x16xf32>, vector<1x16xf32>, vector<1x16xf32>, vector<1x16xf32>, vector<1x16xf32>, vector<1x16xf32>, vector<1x16xf32>, vector<1x16xf32>, vector<1x16xf32> -> vector<1x256xf32>
    %97 = tpu.concatenate %74, %77, %80, %83, %86, %89, %92, %95 in 1 : vector<1x16xf32>, vector<1x16xf32>, vector<1x16xf32>, vector<1x16xf32>, vector<1x16xf32>, vector<1x16xf32>, vector<1x16xf32>, vector<1x16xf32> -> vector<1x128xf32>
    %98 = tpu.concatenate %96, %97 in 1 : vector<1x256xf32>, vector<1x128xf32> -> vector<1x384xf32>
    %c0_32 = arith.constant 0 : index
    %c0_33 = arith.constant 0 : index
    %99 = vector.load %arg4[%c0_32, %c0_33] : memref<384x32xf32, #tpu.memory_space<vmem>>, vector<384x32xf32>
    %cst_34 = arith.constant dense<0.000000e+00> : vector<1x32xf32>
    %100 = tpu.matmul %98, %99, %cst_34 {dimension_numbers = #tpu.dot_dimension_numbers<[1], [0], [0], [1], [0, 0, 1, 1], [], []>} : vector<1x384xf32>, vector<384x32xf32>, vector<1x32xf32> -> vector<1x32xf32>
    %c0_35 = arith.constant 0 : index
    %c0_36 = arith.constant 0 : index
    %101 = vector.load %arg5[%c0_35, %c0_36] : memref<1x32xf32, #tpu.memory_space<vmem>>, vector<1x32xf32>
    %102 = arith.addf %100, %101 : vector<1x32xf32>
    %cst_37 = arith.constant 0.000000e+00 : f32
    %103 = vector.broadcast %cst_37 : f32 to vector<1x32xf32>
    %104 = arith.maximumf %102, %103 : vector<1x32xf32>
    %c0_38 = arith.constant 0 : index
    %c0_39 = arith.constant 0 : index
    %105 = vector.load %arg6[%c0_38, %c0_39] : memref<32x8xf32, #tpu.memory_space<vmem>>, vector<32x8xf32>
    %cst_40 = arith.constant dense<0.000000e+00> : vector<1x8xf32>
    %106 = tpu.matmul %104, %105, %cst_40 {dimension_numbers = #tpu.dot_dimension_numbers<[1], [0], [0], [1], [0, 0, 1, 1], [], []>} : vector<1x32xf32>, vector<32x8xf32>, vector<1x8xf32> -> vector<1x8xf32>
    %c0_41 = arith.constant 0 : index
    %c0_42 = arith.constant 0 : index
    %107 = vector.load %arg7[%c0_41, %c0_42] : memref<1x8xf32, #tpu.memory_space<vmem>>, vector<1x8xf32>
    %108 = arith.addf %106, %107 : vector<1x8xf32>
    %c0_43 = arith.constant 0 : index
    %c0_44 = arith.constant 0 : index
    %c0_45 = arith.constant 0 : index
    %109 = vector.load %arg8[%c0_43, %c0_44, %c0_45] : memref<1x1x8xf32, #tpu.memory_space<vmem>>, vector<1x1x8xf32>
    %110 = vector.shape_cast %109 : vector<1x1x8xf32> to vector<1x8xf32>
    %111 = vector.shape_cast %108 : vector<1x8xf32> to vector<1x1x8xf32>
    tpu.vector_store %arg8[%c0_43, %c0_44, %c0_45], %111 {strides = array<i32>} : memref<1x1x8xf32, #tpu.memory_space<vmem>>, vector<1x1x8xf32>,
    return
  }
  func.func @transform_0(%arg0: i32) -> (i32, i32, i32) {
    %c0_i32 = arith.constant 0 : i32
    %c0_i32_0 = arith.constant 0 : i32
    %c0_i32_1 = arith.constant 0 : i32
    return %arg0, %c0_i32, %c0_i32_0 : i32, i32, i32
  }
  func.func @transform_1(%arg0: i32) -> (i32, i32) {
    %c0_i32 = arith.constant 0 : i32
    %c0_i32_0 = arith.constant 0 : i32
    %c0_i32_1 = arith.constant 0 : i32
    return %c0_i32, %c0_i32_0 : i32, i32
  }
  func.func @transform_2(%arg0: i32) -> (i32, i32) {
    %c0_i32 = arith.constant 0 : i32
    %c0_i32_0 = arith.constant 0 : i32
    %c0_i32_1 = arith.constant 0 : i32
    return %c0_i32, %c0_i32_0 : i32, i32
  }
  func.func @transform_3(%arg0: i32) -> (i32, i32) {
    %c0_i32 = arith.constant 0 : i32
    %c0_i32_0 = arith.constant 0 : i32
    %c0_i32_1 = arith.constant 0 : i32
    return %c0_i32, %c0_i32_0 : i32, i32
  }
  func.func @transform_4(%arg0: i32) -> (i32, i32) {
    %c0_i32 = arith.constant 0 : i32
    %c0_i32_0 = arith.constant 0 : i32
    %c0_i32_1 = arith.constant 0 : i32
    return %c0_i32, %c0_i32_0 : i32, i32
  }
  func.func @transform_5(%arg0: i32) -> (i32, i32) {
    %c0_i32 = arith.constant 0 : i32
    %c0_i32_0 = arith.constant 0 : i32
    %c0_i32_1 = arith.constant 0 : i32
    return %c0_i32, %c0_i32_0 : i32, i32
  }
  func.func @transform_6(%arg0: i32) -> (i32, i32) {
    %c0_i32 = arith.constant 0 : i32
    %c0_i32_0 = arith.constant 0 : i32
    %c0_i32_1 = arith.constant 0 : i32
    return %c0_i32, %c0_i32_0 : i32, i32
  }
  func.func @transform_7(%arg0: i32) -> (i32, i32, i32) {
    %c0_i32 = arith.constant 0 : i32
    %c0_i32_0 = arith.constant 0 : i32
    %c0_i32_1 = arith.constant 0 : i32
    return %arg0, %c0_i32, %c0_i32_0 : i32, i32, i32
  }
}

</mosaic_0001>

<llo_original>
// kernel: forward.1
$region0: #{forward.1}
  #allocation0 [shape = 'u32[]', space=smem, size = 0x4, offset = 0x4, fixed_abs, tag = 'smem constant byte address 0x4 - core index']
  #allocation1 [shape = 'u32[144,128]{1,0:T(1,128)}', space=vmem, size = 0x12000, scoped, tag = 'internal scratch']
  %s0 = inlined_call_operand.vmem [shape: f32[2,16,32], index: 0, kind: input, shape index: {}]
  %s1 = inlined_call_operand.vmem [shape: f32[288,48], index: 1, kind: input, shape index: {}]
  %s2 = inlined_call_operand.vmem [shape: f32[1,48], index: 2, kind: input, shape index: {}]
  %s3 = inlined_call_operand.vmem [shape: f32[384,32], index: 3, kind: input, shape index: {}]
  %s4 = inlined_call_operand.vmem [shape: f32[1,32], index: 4, kind: input, shape index: {}]
  %s5 = inlined_call_operand.vmem [shape: f32[32,8], index: 5, kind: input, shape index: {}]
  %s6 = inlined_call_operand.vmem [shape: f32[1,8], index: 6, kind: input, shape index: {}]
  %s7 = inlined_call_operand.hbm [shape: f32[2,1,8], index: 7, kind: output, shape index: {}]
  %s8 = sld [smem:[#allocation0]]
  $region61: #{forward.1} parent=0
    _
  %s10 = ssub.s32 1, %s8
  %s11 = scalar_select 0, %s10, %s8
  $region1: #{forward.1} parent=0
    #allocation2 [shape = 'u8[1024]{0}', space=vmem, size = 0x400, scoped, tag = 'output window, operand 0']
    #allocation3 [shape = 's32[2]{0}', space=sflag, size = 0x8, scoped, tag = 'scoped memory for forward.1']
    %12 = vsyncpa [#allocation3], 0
    %s13 = scalar_lea.sflag [#allocation3], 1
    %14 = vsyncpa %s13, 0
    loop: start=0, step=1, limit=4
    $region2: #{forward.1} parent=1 // loop_pre_header
      _
    $region3: #{forward.1} parent=1 // loop_header
      %s16 = sphi 0, %s20
      %p17 = scmp.ge.s32.totalorder %s16, 4
      %s26 = sphi 0, %s28
      %s29 = sphi 0, %s26
      %s30 = sphi 0, %s29
      %s46 = sphi 0, %s30
      %s50 = sphi 0, %s50
      %s52 = sphi 0, %s50
      %s53 = sphi 0, %s52
      %s67 = sphi 0, %s53
      %s71 = sphi 0, %s71
      %s73 = sphi 0, %s71
      %s74 = sphi 0, %s73
      %s88 = sphi 0, %s74
      %s92 = sphi 0, %s92
      %s94 = sphi 0, %s92
      %s95 = sphi 0, %s94
      %s109 = sphi 0, %s95
      %s113 = sphi 0, %s113
      %s115 = sphi 0, %s113
      %s116 = sphi 0, %s115
      %s130 = sphi 0, %s116
      %s134 = sphi 0, %s134
      %s136 = sphi 0, %s134
      %s137 = sphi 0, %s136
      %s151 = sphi 0, %s137
      %s155 = sphi 0, %s155
      %s157 = sphi 0, %s155
      %s158 = sphi 0, %s157
      %s172 = sphi 0, %s158
      %s178 = sphi 0, %s180
      %s181 = sphi 0, %s178
      %s182 = sphi 0, %s181
      %s198 = sphi 0, %s182
    $region4: #{forward.1} parent=1 // loop_header_branch
      %19 = sbr.rel (%p17) target = $region8
    $region5: #{forward.1} parent=1 // loop_body
      %s21 = ssub.s32 %s16, 1
      %s22 = ssub.s32 %s16, 2
      %s23 = sadd.s32 %s16, 1
      %s24 = ssub.s32 %s16, %s23
      %p25 = scmp.eq.s32.totalorder %s24, 0
      %s27 = sadd.s32 %s26, 1
      %s28 = scalar_select %p25, %s26, %s27
      %p31 = pneg %p25
      %p32 = scmp.eq.s32.totalorder %s16, 1
      %p33 = por %p31, %p32
      %p34 = scmp.ne.s32.totalorder %s26, %s29
      %p35 = scmp.eq.s32.totalorder %s16, 0
      %p36 = por %p34, %p35
      %p37 = scmp.ne.s32.totalorder %s26, %s29
      %p38 = scmp.eq.s32.totalorder %s21, 1
      %p39 = por %p37, %p38
      %p40 = scmp.ne.s32.totalorder %s29, %s30
      %p41 = scmp.eq.s32.totalorder %s21, 0
      %p42 = por %p40, %p41
      %p43 = scmp.ne.s32.totalorder %s29, %s30
      %p44 = scmp.eq.s32.totalorder %s22, 1
      %p45 = por %p43, %p44
      %p47 = scmp.ne.s32.totalorder %s30, %s46
      %p48 = scmp.eq.s32.totalorder %s22, 0
      %p49 = por %p47, %p48
      %s51 = sadd.s32 %s50, 1
      %p54 = scmp.eq.s32.totalorder %s16, 1
      %p55 = scmp.ne.s32.totalorder %s50, %s52
      %p56 = scmp.eq.s32.totalorder %s16, 0
      %p57 = por %p55, %p56
      %p58 = scmp.ne.s32.totalorder %s50, %s52
      %p59 = scmp.eq.s32.totalorder %s21, 1
      %p60 = por %p58, %p59
      %p61 = scmp.ne.s32.totalorder %s52, %s53
      %p62 = scmp.eq.s32.totalorder %s21, 0
      %p63 = por %p61, %p62
      %p64 = scmp.ne.s32.totalorder %s52, %s53
      %p65 = scmp.eq.s32.totalorder %s22, 1
      %p66 = por %p64, %p65
      %p68 = scmp.ne.s32.totalorder %s53, %s67
      %p69 = scmp.eq.s32.totalorder %s22, 0
      %p70 = por %p68, %p69
      %s72 = sadd.s32 %s71, 1
      %p75 = scmp.eq.s32.totalorder %s16, 1
      %p76 = scmp.ne.s32.totalorder %s71, %s73
      %p77 = scmp.eq.s32.totalorder %s16, 0
      %p78 = por %p76, %p77
      %p79 = scmp.ne.s32.totalorder %s71, %s73
      %p80 = scmp.eq.s32.totalorder %s21, 1
      %p81 = por %p79, %p80
      %p82 = scmp.ne.s32.totalorder %s73, %s74
      %p83 = scmp.eq.s32.totalorder %s21, 0
      %p84 = por %p82, %p83
      %p85 = scmp.ne.s32.totalorder %s73, %s74
      %p86 = scmp.eq.s32.totalorder %s22, 1
      %p87 = por %p85, %p86
      %p89 = scmp.ne.s32.totalorder %s74, %s88
      %p90 = scmp.eq.s32.totalorder %s22, 0
      %p91 = por %p89, %p90
      %s93 = sadd.s32 %s92, 1
      %p96 = scmp.eq.s32.totalorder %s16, 1
      %p97 = scmp.ne.s32.totalorder %s92, %s94
      %p98 = scmp.eq.s32.totalorder %s16, 0
      %p99 = por %p97, %p98
      %p100 = scmp.ne.s32.totalorder %s92, %s94
      %p101 = scmp.eq.s32.totalorder %s21, 1
      %p102 = por %p100, %p101
      %p103 = scmp.ne.s32.totalorder %s94, %s95
      %p104 = scmp.eq.s32.totalorder %s21, 0
      %p105 = por %p103, %p104
      %p106 = scmp.ne.s32.totalorder %s94, %s95
      %p107 = scmp.eq.s32.totalorder %s22, 1
      %p108 = por %p106, %p107
      %p110 = scmp.ne.s32.totalorder %s95, %s109
      %p111 = scmp.eq.s32.totalorder %s22, 0
      %p112 = por %p110, %p111
      %s114 = sadd.s32 %s113, 1
      %p117 = scmp.eq.s32.totalorder %s16, 1
      %p118 = scmp.ne.s32.totalorder %s113, %s115
      %p119 = scmp.eq.s32.totalorder %s16, 0
      %p120 = por %p118, %p119
      %p121 = scmp.ne.s32.totalorder %s113, %s115
      %p122 = scmp.eq.s32.totalorder %s21, 1
      %p123 = por %p121, %p122
      %p124 = scmp.ne.s32.totalorder %s115, %s116
      %p125 = scmp.eq.s32.totalorder %s21, 0
      %p126 = por %p124, %p125
      %p127 = scmp.ne.s32.totalorder %s115, %s116
      %p128 = scmp.eq.s32.totalorder %s22, 1
      %p129 = por %p127, %p128
      %p131 = scmp.ne.s32.totalorder %s116, %s130
      %p132 = scmp.eq.s32.totalorder %s22, 0
      %p133 = por %p131, %p132
      %s135 = sadd.s32 %s134, 1
      %p138 = scmp.eq.s32.totalorder %s16, 1
      %p139 = scmp.ne.s32.totalorder %s134, %s136
      %p140 = scmp.eq.s32.totalorder %s16, 0
      %p141 = por %p139, %p140
      %p142 = scmp.ne.s32.totalorder %s134, %s136
      %p143 = scmp.eq.s32.totalorder %s21, 1
      %p144 = por %p142, %p143
      %p145 = scmp.ne.s32.totalorder %s136, %s137
      %p146 = scmp.eq.s32.totalorder %s21, 0
      %p147 = por %p145, %p146
      %p148 = scmp.ne.s32.totalorder %s136, %s137
      %p149 = scmp.eq.s32.totalorder %s22, 1
      %p150 = por %p148, %p149
      %p152 = scmp.ne.s32.totalorder %s137, %s151
      %p153 = scmp.eq.s32.totalorder %s22, 0
      %p154 = por %p152, %p153
      %s156 = sadd.s32 %s155, 1
      %p159 = scmp.eq.s32.totalorder %s16, 1
      %p160 = scmp.ne.s32.totalorder %s155, %s157
      %p161 = scmp.eq.s32.totalorder %s16, 0
      %p162 = por %p160, %p161
      %p163 = scmp.ne.s32.totalorder %s155, %s157
      %p164 = scmp.eq.s32.totalorder %s21, 1
      %p165 = por %p163, %p164
      %p166 = scmp.ne.s32.totalorder %s157, %s158
      %p167 = scmp.eq.s32.totalorder %s21, 0
      %p168 = por %p166, %p167
      %p169 = scmp.ne.s32.totalorder %s157, %s158
      %p170 = scmp.eq.s32.totalorder %s22, 1
      %p171 = por %p169, %p170
      %p173 = scmp.ne.s32.totalorder %s158, %s172
      %p174 = scmp.eq.s32.totalorder %s22, 0
      %p175 = por %p173, %p174
      %s176 = ssub.s32 %s16, %s23
      %p177 = scmp.eq.s32.totalorder %s176, 0
      %s179 = sadd.s32 %s178, 1
      %s180 = scalar_select %p177, %s178, %s179
      %p183 = pneg %p177
      %p184 = scmp.eq.s32.totalorder %s16, 1
      %p185 = por %p183, %p184
      %p186 = scmp.ne.s32.totalorder %s178, %s181
      %p187 = scmp.eq.s32.totalorder %s16, 0
      %p188 = por %p186, %p187
      %p189 = scmp.ne.s32.totalorder %s178, %s181
      %p190 = scmp.eq.s32.totalorder %s21, 1
      %p191 = por %p189, %p190
      %p192 = scmp.ne.s32.totalorder %s181, %s182
      %p193 = scmp.eq.s32.totalorder %s21, 0
      %p194 = por %p192, %p193
      %p195 = scmp.ne.s32.totalorder %s181, %s182
      %p196 = scmp.eq.s32.totalorder %s22, 1
      %p197 = por %p195, %p196
      %p199 = scmp.ne.s32.totalorder %s182, %s198
      %p200 = scmp.eq.s32.totalorder %s22, 0
      %p201 = por %p199, %p200
      %p202 = scmp.le.s32.totalorder 1, %s16
      %p203 = scmp.lt.s32.totalorder %s16, 3
      %p204 = pnand %p202, %p203
      %p205 = pneg %p204
      // Predicated region
      $region9: #{forward.1} parent=5 // pred_check
        _
      $region10: #{forward.1} parent=5 // pred_check_branch
        %207 = sbr.rel (%p204) target = $region12
      $region11: #{forward.1} parent=5 // pred_region
        %s208 = ssub.s32 %s16, 1
        // Predicated region
        $region13: #{forward.1} parent=11 // pred_check
          %p209 = pneg %p63
        $region14: #{forward.1} parent=11 // pred_check_branch
          %211 = sbr.rel (%p209) target = $region16
        $region15: #{forward.1} parent=11 // pred_region
          _
        $region16: #{forward.1} parent=11 // pred_fallthru
          _
        // Predicated region
        $region17: #{forward.1} parent=11 // pred_check
          %p212 = pneg %p84
        $region18: #{forward.1} parent=11 // pred_check_branch
          %214 = sbr.rel (%p212) target = $region20
        $region19: #{forward.1} parent=11 // pred_region
          _
        $region20: #{forward.1} parent=11 // pred_fallthru
          _
        // Predicated region
        $region21: #{forward.1} parent=11 // pred_check
          %p215 = pneg %p105
        $region22: #{forward.1} parent=11 // pred_check_branch
          %217 = sbr.rel (%p215) target = $region24
        $region23: #{forward.1} parent=11 // pred_region
          _
        $region24: #{forward.1} parent=11 // pred_fallthru
          _
        // Predicated region
        $region25: #{forward.1} parent=11 // pred_check
          %p218 = pneg %p126
        $region26: #{forward.1} parent=11 // pred_check_branch
          %220 = sbr.rel (%p218) target = $region28
        $region27: #{forward.1} parent=11 // pred_region
          _
        $region28: #{forward.1} parent=11 // pred_fallthru
          _
        // Predicated region
        $region29: #{forward.1} parent=11 // pred_check
          %p221 = pneg %p147
        $region30: #{forward.1} parent=11 // pred_check_branch
          %223 = sbr.rel (%p221) target = $region32
        $region31: #{forward.1} parent=11 // pred_region
          _
        $region32: #{forward.1} parent=11 // pred_fallthru
          _
        // Predicated region
        $region33: #{forward.1} parent=11 // pred_check
          %p224 = pneg %p168
        $region34: #{forward.1} parent=11 // pred_check_branch
          %226 = sbr.rel (%p224) target = $region36
        $region35: #{forward.1} parent=11 // pred_region
          _
        $region36: #{forward.1} parent=11 // pred_fallthru
          _
      $region12: #{forward.1} parent=5 // pred_fallthru
        _
      %p227 = scmp.lt.s32.totalorder %s16, 2
      // Predicated region
      $region37: #{forward.1} parent=5 // pred_check
        %p228 = pneg %p227
      $region38: #{forward.1} parent=5 // pred_check_branch
        %230 = sbr.rel (%p228) target = $region40
      $region39: #{forward.1} parent=5 // pred_region
        // Predicated region
        $region41: #{forward.1} parent=39 // pred_check
          %p231 = pneg %p36
        $region42: #{forward.1} parent=39 // pred_check_branch
          %233 = sbr.rel (%p231) target = $region44
        $region43: #{forward.1} parent=39 // pred_region
          %p234 = scmp.lt.s32.totalorder %s16, 1
          %s235 = scalar_select %p234, %s16, 1
          %s236 = smul.addr %s235, 2
          %s237 = smul.addr %s236, 8
          %s238 = scalar_lea.vmem %s0, %s237
        $region44: #{forward.1} parent=39 // pred_fallthru
          _
      $region40: #{forward.1} parent=5 // pred_fallthru
        _
      %p239 = scmp.le.s32.totalorder 1, %s16
      %p240 = scmp.lt.s32.totalorder %s16, 3
      %p241 = pnand %p239, %p240
      %p242 = pneg %p241
      // Predicated region
      $region45: #{forward.1} parent=5 // pred_check
        _
      $region46: #{forward.1} parent=5 // pred_check_branch
        %244 = sbr.rel (%p241) target = $region48
      $region47: #{forward.1} parent=5 // pred_region
        %s245 = ssub.s32 %s16, 1
        %p246 = scmp.lt.s32.totalorder %s21, 1
        %s247 = scalar_select %p246, %s21, 1
        %s248 = smul.addr %s247, 2
        %s249 = smul.addr %s248, 8
        %s250 = scalar_lea.vmem %s0, %s249
        %p251 = pneg %p42
        %p252 = pneg %p39
        %p253 = pneg %p63
        %p254 = pneg %p60
        %p255 = pneg %p84
        %p256 = pneg %p81
        %p257 = pneg %p105
        %p258 = pneg %p102
        %p259 = pneg %p126
        %p260 = pneg %p123
        %p261 = pneg %p147
        %p262 = pneg %p144
        %p263 = pneg %p168
        %p264 = pneg %p165
        %p265 = pneg %p194
        %p266 = pneg %p191
        %s267 = sand.u32 %s181, 1
        %s268 = scalar_lea.sflag [#allocation3], %s267
        %s269 = sand.u32 %s181, 1
        %s270 = scalar_lea.vmem [#allocation2], %s269
        %p271 = scmp.lt.s32.totalorder %s21, 1
        %s272 = scalar_select %p271, %s21, 1
        %s273 = smul.addr %s272, 2
        %s274 = smul.addr %s273, 8
        %s275 = scalar_lea.vmem %s0, %s274
        %v276 = vld [vmem:[%s275] sm:$0xff]
        %v277 = vld [vmem:[%s275 + $0x8] sm:$0xff]
        %vm280 = vcmask 1046528
        %v281 = vrot.slane %v276, 1
        %v282 = vrot.slane %v277, 1
        %v283 = vsel %vm280, %v281, %v282
        %284 = vrot.lane.b32.xlu0 %v283, 32
        %v285 = vpop.permute.xlu0 %284
        %286 = vrot.lane.b32.xlu0 %v282, 32
        %v287 = vpop.permute.xlu0 %286
        %vm290 = vcmask 1045504
        %v291 = vrot.slane %v276, 2
        %v292 = vrot.slane %v277, 2
        %v293 = vsel %vm290, %v291, %v292
        %294 = vrot.lane.b32.xlu0 %v293, 64
        %v295 = vpop.permute.xlu0 %294
        %296 = vrot.lane.b32.xlu0 %v292, 64
        %v297 = vpop.permute.xlu0 %296
        %vm301 = vcmask 1044480
        %v302 = vrot.slane %v276, 3
        %v303 = vrot.slane %v277, 3
        %v304 = vsel %vm301, %v302, %v303
        %v305 = vrot.slane 0.0, 3
        %v306 = vsel %vm301, %v303, %v305
        %307 = vrot.lane.b32.xlu0 %v304, 96
        %v308 = vpop.permute.xlu0 %307
        %309 = vrot.lane.b32.xlu0 %v306, 96
        %v310 = vpop.permute.xlu0 %309
        %vm313 = vcmask 1043456
        %v314 = vrot.slane %v276, 4
        %v315 = vrot.slane %v277, 4
        %v316 = vsel %vm313, %v314, %v315
        %v317 = vrot.slane 0.0, 4
        %v318 = vsel %vm313, %v315, %v317
        %vm321 = vcmask 1042432
        %v322 = vrot.slane %v276, 5
        %v323 = vrot.slane %v277, 5
        %v324 = vsel %vm321, %v322, %v323
        %v325 = vrot.slane 0.0, 5
        %v326 = vsel %vm321, %v323, %v325
        %327 = vrot.lane.b32.xlu0 %v324, 32
        %v328 = vpop.permute.xlu0 %327
        %329 = vrot.lane.b32.xlu0 %v326, 32
        %v330 = vpop.permute.xlu0 %329
        %vm333 = vcmask 1041408
        %v334 = vrot.slane %v276, 6
        %v335 = vrot.slane %v277, 6
        %v336 = vsel %vm333, %v334, %v335
        %v337 = vrot.slane 0.0, 6
        %v338 = vsel %vm333, %v335, %v337
        %339 = vrot.lane.b32.xlu0 %v336, 64
        %v340 = vpop.permute.xlu0 %339
        %341 = vrot.lane.b32.xlu0 %v338, 64
        %v342 = vpop.permute.xlu0 %341
        %vm345 = vcmask 1040384
        %v346 = vrot.slane %v276, 7
        %v347 = vrot.slane %v277, 7
        %v348 = vsel %vm345, %v346, %v347
        %v349 = vrot.slane 0.0, 7
        %v350 = vsel %vm345, %v347, %v349
        %351 = vrot.lane.b32.xlu0 %v348, 96
        %v352 = vpop.permute.xlu0 %351
        %353 = vrot.lane.b32.xlu0 %v350, 96
        %v354 = vpop.permute.xlu0 %353
        %vm357 = vcmask 261120
        %v358 = vsel %vm357, %v276, %v285
        %v359 = vsel %vm357, %v277, %v287
        %vm360 = vcmask 523264
        %v361 = vsel %vm360, %v358, %v295
        %v362 = vsel %vm360, %v359, %v297
        %vm363 = vcmask 785408
        %v364 = vsel %vm363, %v361, %v308
        %v365 = vsel %vm363, %v362, %v310
        %v366 = vsel %vm357, %v316, %v328
        %v367 = vsel %vm357, %v318, %v330
        %v368 = vsel %vm360, %v366, %v340
        %v369 = vsel %vm360, %v367, %v342
        %v370 = vsel %vm363, %v368, %v352
        %v371 = vsel %vm363, %v369, %v354
        %v372 = vld [vmem:[%s1] sm:$0xff]
        %v373 = vld [vmem:[%s1 + $0x8] sm:$0xff]
        %v374 = vld [vmem:[%s1 + $0x10] sm:$0xff]
        %v375 = vld [vmem:[%s1 + $0x18] sm:$0xff]
        %v376 = vld [vmem:[%s1 + $0x20] sm:$0xff]
        %v377 = vld [vmem:[%s1 + $0x28] sm:$0xff]
        %v378 = vld [vmem:[%s1 + $0x30] sm:$0xff]
        %v379 = vld [vmem:[%s1 + $0x38] sm:$0xff]
        %v380 = vld [vmem:[%s1 + $0x40] sm:$0xff]
        %v381 = vld [vmem:[%s1 + $0x48] sm:$0xff]
        %v382 = vld [vmem:[%s1 + $0x50] sm:$0xff]
        %v383 = vld [vmem:[%s1 + $0x58] sm:$0xff]
        %v384 = vld [vmem:[%s1 + $0x60] sm:$0xff]
        %v385 = vld [vmem:[%s1 + $0x68] sm:$0xff]
        %v386 = vld [vmem:[%s1 + $0x70] sm:$0xff]
        %v387 = vld [vmem:[%s1 + $0x78] sm:$0xff]
        %v388 = vld [vmem:[%s1 + $0x80] sm:$0xff]
        %v389 = vld [vmem:[%s1 + $0x88] sm:$0xff]
        %v390 = vld [vmem:[%s1 + $0x90] sm:$0xff]
        %v391 = vld [vmem:[%s1 + $0x98] sm:$0xff]
        %v392 = vld [vmem:[%s1 + $0xa0] sm:$0xff]
        %v393 = vld [vmem:[%s1 + $0xa8] sm:$0xff]
        %v394 = vld [vmem:[%s1 + $0xb0] sm:$0xff]
        %v395 = vld [vmem:[%s1 + $0xb8] sm:$0xff]
        %v396 = vld [vmem:[%s1 + $0xc0] sm:$0xff]
        %v397 = vld [vmem:[%s1 + $0xc8] sm:$0xff]
        %v398 = vld [vmem:[%s1 + $0xd0] sm:$0xff]
        %v399 = vld [vmem:[%s1 + $0xd8] sm:$0xff]
        %v400 = vld [vmem:[%s1 + $0xe0] sm:$0xff]
        %v401 = vld [vmem:[%s1 + $0xe8] sm:$0xff]
        %v402 = vld [vmem:[%s1 + $0xf0] sm:$0xff]
        %v403 = vld [vmem:[%s1 + $0xf8] sm:$0xff]
        %v404 = vld [vmem:[%s1 + $0x100] sm:$0xff]
        %v405 = vld [vmem:[%s1 + $0x108] sm:$0xff]
        %v406 = vld [vmem:[%s1 + $0x110] sm:$0xff]
        %v407 = vld [vmem:[%s1 + $0x118] sm:$0xff]
        %v408 = vld [vmem:[%s2] sm:$0x1]
        %v410 = vlaneseq
        %v411 = vshrl.u32 %v410, 7
        %v412 = vsub.s32 0, %v411
        %v413 = vrot.slane %v408, %v412
        %v415 = vsel %vm357, %v277, 0
        %v417 = vsel %vm357, 0.0, 0
        %419 = vmatprep.subr.mxu0 0.0
        %420 = vmatpush1.msra.mxu0 %v372
        %421 = vmatprep.subr.mxu0 0.0
        %422 = vmatpush1.msra.mxu0 %v373
        %423 = vmatprep.subr.mxu0 0.0
        %424 = vmatpush1.msra.mxu0 %v374
        %425 = vmatprep.subr.mxu0 0.0
        %426 = vmatpush1.msra.mxu0 %v375
        %427 = vmatprep.subr.mxu0 0.0
        %428 = vmatpush1.msra.mxu0 %v376
        %429 = vmatprep.subr.mxu0 0.0
        %430 = vmatpush1.msra.mxu0 %v377
        %431 = vmatprep.subr.mxu0 0.0
        %432 = vmatpush1.msra.mxu0 %v378
        %433 = vmatprep.subr.mxu0 0.0
        %434 = vmatpush1.msra.mxu0 %v379
        %435 = vmatprep.subr.mxu0 0.0
        %436 = vmatpush1.msra.mxu0 %v380
        %437 = vmatprep.subr.mxu0 0.0
        %438 = vmatpush1.msra.mxu0 %v381
        %439 = vmatprep.subr.mxu0 0.0
        %440 = vmatpush1.msra.mxu0 %v382
        %441 = vmatprep.subr.mxu0 0.0
        %442 = vmatpush1.msra.mxu0 %v383
        %443 = vmatprep.subr.mxu0 0.0
        %444 = vmatpush1.msra.mxu0 %v384
        %445 = vmatprep.subr.mxu0 0.0
        %446 = vmatpush1.msra.mxu0 %v385
        %447 = vmatprep.subr.mxu0 0.0
        %448 = vmatpush1.msra.mxu0 %v386
        %449 = vmatprep.subr.mxu0 0.0
        %450 = vmatpush1.msra.mxu0 %v387
        %451 = vmatprep.subr.mxu0 0.0
        %452 = vmatpush1.msra.mxu0 %v388
        %453 = vmatprep.subr.mxu0 0.0
        %454 = vmatpush1.msra.mxu0 %v389
        %455 = vmatprep.subr.mxu0 0.0
        %456 = vmatpush1.msra.mxu0 %v390
        %457 = vmatprep.subr.mxu0 0.0
        %458 = vmatpush1.msra.mxu0 %v391
        %459 = vmatprep.subr.mxu0 0.0
        %460 = vmatpush1.msra.mxu0 %v392
        %461 = vmatprep.subr.mxu0 0.0
        %462 = vmatpush1.msra.mxu0 %v393
        %463 = vmatprep.subr.mxu0 0.0
        %464 = vmatpush1.msra.mxu0 %v394
        %465 = vmatprep.subr.mxu0 0.0
        %466 = vmatpush1.msra.mxu0 %v395
        %467 = vmatprep.subr.mxu0 0.0
        %468 = vmatpush1.msra.mxu0 %v396
        %469 = vmatprep.subr.mxu0 0.0
        %470 = vmatpush1.msra.mxu0 %v397
        %471 = vmatprep.subr.mxu0 0.0
        %472 = vmatpush1.msra.mxu0 %v398
        %473 = vmatprep.subr.mxu0 0.0
        %474 = vmatpush1.msra.mxu0 %v399
        %475 = vmatprep.subr.mxu0 0.0
        %476 = vmatpush1.msra.mxu0 %v400
        %477 = vmatprep.subr.mxu0 0.0
        %478 = vmatpush1.msra.mxu0 %v401
        %479 = vmatprep.subr.mxu0 0.0
        %480 = vmatpush1.msra.mxu0 %v402
        %481 = vmatprep.subr.mxu0 0.0
        %482 = vmatpush1.msra.mxu0 %v403
        %483 = vmatprep.mubr.f32.mxu0 %v370
        %484 = vmatmul.mubr.f32.gmra.mrb[0].mxu0 %v364
        %v485 = vpop.f32.mrb[0].mxu0
        %v486 = vadd.f32 %v413, %v485
        %v487 = vpop.f32.mrb[0].mxu0
        %488 = vmatprep.mubr.f32.mxu0 %v371
        %489 = vmatmul.mubr.f32.gmra.mrb[0].mxu0 %v365
        %v490 = vpop.f32.mrb[0].mxu0
        %v491 = vadd.f32 %v413, %v490
        %v492 = vpop.f32.mrb[0].mxu0
        %493 = vdwg.mxu0
        %494 = vmatprep.subr.mxu0 0.0
        %495 = vmatpush1.msra.mxu0 %v404
        %496 = vmatprep.subr.mxu0 0.0
        %497 = vmatpush1.msra.mxu0 %v405
        %498 = vmatprep.subr.mxu0 0.0
        %499 = vmatpush1.msra.mxu0 %v406
        %500 = vmatprep.subr.mxu0 0.0
        %501 = vmatpush1.msra.mxu0 %v407
        %502 = vmatprep.subr.mxu0 0.0
        %503 = vmatpush1.msra.mxu0 0.0
        %504 = vmatprep.subr.mxu0 0.0
        %505 = vmatpush1.msra.mxu0 0.0
        %506 = vmatprep.subr.mxu0 0.0
        %507 = vmatpush1.msra.mxu0 0.0
        %508 = vmatprep.subr.mxu0 0.0
        %509 = vmatpush1.msra.mxu0 0.0
        %510 = vmatprep.subr.mxu0 0.0
        %511 = vmatpush1.msra.mxu0 0.0
        %512 = vmatprep.subr.mxu0 0.0
        %513 = vmatpush1.msra.mxu0 0.0
        %514 = vmatprep.subr.mxu0 0.0
        %515 = vmatpush1.msra.mxu0 0.0
        %516 = vmatprep.subr.mxu0 0.0
        %517 = vmatpush1.msra.mxu0 0.0
        %518 = vmatprep.subr.mxu0 0.0
        %519 = vmatpush1.msra.mxu0 0.0
        %520 = vmatprep.subr.mxu0 0.0
        %521 = vmatpush1.msra.mxu0 0.0
        %522 = vmatprep.subr.mxu0 0.0
        %523 = vmatpush1.msra.mxu0 0.0
        %524 = vmatprep.subr.mxu0 0.0
        %525 = vmatpush1.msra.mxu0 0.0
        %526 = vmatprep.subr.mxu0 0.0
        %527 = vmatpush1.msra.mxu0 0.0
        %528 = vmatprep.subr.mxu0 0.0
        %529 = vmatpush1.msra.mxu0 0.0
        %530 = vmatprep.subr.mxu0 0.0
        %531 = vmatpush1.msra.mxu0 0.0
        %532 = vmatprep.subr.mxu0 0.0
        %533 = vmatpush1.msra.mxu0 0.0
        %534 = vmatprep.subr.mxu0 0.0
        %535 = vmatpush1.msra.mxu0 0.0
        %536 = vmatprep.subr.mxu0 0.0
        %537 = vmatpush1.msra.mxu0 0.0
        %538 = vmatprep.subr.mxu0 0.0
        %539 = vmatpush1.msra.mxu0 0.0
        %540 = vmatprep.subr.mxu0 0.0
        %541 = vmatpush1.msra.mxu0 0.0
        %542 = vmatprep.subr.mxu0 0.0
        %543 = vmatpush1.msra.mxu0 0.0
        %544 = vmatprep.subr.mxu0 0.0
        %545 = vmatpush1.msra.mxu0 0.0
        %546 = vmatprep.subr.mxu0 0.0
        %547 = vmatpush1.msra.mxu0 0.0
        %548 = vmatprep.subr.mxu0 0.0
        %549 = vmatpush1.msra.mxu0 0.0
        %550 = vmatprep.subr.mxu0 0.0
        %551 = vmatpush1.msra.mxu0 0.0
        %552 = vmatprep.subr.mxu0 0.0
        %553 = vmatpush1.msra.mxu0 0.0
        %554 = vmatprep.subr.mxu0 0.0
        %555 = vmatpush1.msra.mxu0 0.0
        %556 = vmatprep.subr.mxu0 0.0
        %557 = vmatpush1.msra.mxu0 0.0
        %558 = vmatprep.mubr.f32.mxu0 0.0
        %559 = vmatmul.mubr.f32.gmra.mrb[0].mxu0 %v415
        %v560 = vpop.f32.mrb[0].mxu0
        %v561 = vadd.f32 %v486, %v560
        %v562 = vpop.f32.mrb[0].mxu0
        %563 = vmatprep.mubr.f32.mxu0 0.0
        %564 = vmatmul.mubr.f32.gmra.mrb[0].mxu0 %v417
        %v565 = vpop.f32.mrb[0].mxu0
        %v566 = vadd.f32 %v491, %v565
        %v567 = vpop.f32.mrb[0].mxu0
        %568 = vdwg.mxu0
        %v569 = vmax.f32 %v561, 0.0
        %v570 = vmax.f32 %v566, 0.0
        %vm571 = vcmask 123904
        %v572 = vsel %vm571, %v569, -inf
        %v573 = vrot.slane %v572, 4
        %v574 = vmax.f32 %v572, %v573
        %v575 = vrot.slane %v574, 2
        %v576 = vmax.f32 %v574, %v575
        %v577 = vrot.slane %v576, 1
        %v578 = vmax.f32 %v576, %v577
        %vm579 = vcmask 125953
        %v580 = vsel %vm579, %v569, -inf
        %v581 = vrot.slane %v580, 4
        %v582 = vmax.f32 %v580, %v581
        %v583 = vrot.slane %v582, 2
        %v584 = vmax.f32 %v582, %v583
        %v585 = vrot.slane %v584, 1
        %v586 = vmax.f32 %v584, %v585
        %vm587 = vcmask 128003
        %v588 = vsel %vm587, %v569, -inf
        %v589 = vrot.slane %v588, 4
        %v590 = vmax.f32 %v588, %v589
        %v591 = vrot.slane %v590, 2
        %v592 = vmax.f32 %v590, %v591
        %v593 = vrot.slane %v592, 1
        %v594 = vmax.f32 %v592, %v593
        %vm595 = vcmask 129029
        %v596 = vsel %vm595, %v569, -inf
        %v597 = vrot.slane %v596, 4
        %v598 = vmax.f32 %v596, %v597
        %v599 = vrot.slane %v598, 2
        %v600 = vmax.f32 %v598, %v599
        %v601 = vrot.slane %v600, 1
        %v602 = vmax.f32 %v600, %v601
        %vm603 = vcmask 130055
        %v604 = vsel %vm603, %v569, -inf
        %vm605 = vcmask 122880
        %v606 = vsel %vm605, %v570, -inf
        %v607 = vmax.f32 %v604, %v606
        %v608 = vrot.slane %v607, 4
        %v609 = vmax.f32 %v607, %v608
        %v610 = vrot.slane %v609, 2
        %v611 = vmax.f32 %v609, %v610
        %v612 = vrot.slane %v611, 1
        %v613 = vmax.f32 %v611, %v612
        %vm614 = vcmask 124928
        %v615 = vsel %vm614, %v570, -inf
        %v616 = vrot.slane %v615, 4
        %v617 = vmax.f32 %v615, %v616
        %v618 = vrot.slane %v617, 2
        %v619 = vmax.f32 %v617, %v618
        %v620 = vrot.slane %v619, 1
        %v621 = vmax.f32 %v619, %v620
        %vm622 = vcmask 126978
        %v623 = vsel %vm622, %v570, -inf
        %v624 = vrot.slane %v623, 4
        %v625 = vmax.f32 %v623, %v624
        %v626 = vrot.slane %v625, 2
        %v627 = vmax.f32 %v625, %v626
        %v628 = vrot.slane %v627, 1
        %v629 = vmax.f32 %v627, %v628
        %vm630 = vcmask 128004
        %v631 = vsel %vm630, %v570, -inf
        %v632 = vrot.slane %v631, 4
        %v633 = vmax.f32 %v631, %v632
        %v634 = vrot.slane %v633, 2
        %v635 = vmax.f32 %v633, %v634
        %v636 = vrot.slane %v635, 1
        %v637 = vmax.f32 %v635, %v636
        %vm638 = vcmask 255104
        %v639 = vsel %vm638, %v569, -inf
        %v640 = vrot.slane %v639, 4
        %v641 = vmax.f32 %v639, %v640
        %v642 = vrot.slane %v641, 2
        %v643 = vmax.f32 %v641, %v642
        %v644 = vrot.slane %v643, 1
        %v645 = vmax.f32 %v643, %v644
        %vm646 = vcmask 256129
        %v647 = vsel %vm646, %v569, -inf
        %v648 = vrot.slane %v647, 4
        %v649 = vmax.f32 %v647, %v648
        %v650 = vrot.slane %v649, 2
        %v651 = vmax.f32 %v649, %v650
        %v652 = vrot.slane %v651, 1
        %v653 = vmax.f32 %v651, %v652
        %vm654 = vcmask 258179
        %v655 = vsel %vm654, %v569, -inf
        %v656 = vrot.slane %v655, 4
        %v657 = vmax.f32 %v655, %v656
        %v658 = vrot.slane %v657, 2
        %v659 = vmax.f32 %v657, %v658
        %v660 = vrot.slane %v659, 1
        %v661 = vmax.f32 %v659, %v660
        %vm662 = vcmask 259204
        %v663 = vsel %vm662, %v569, -inf
        %v664 = vrot.slane %v663, 4
        %v665 = vmax.f32 %v663, %v664
        %v666 = vrot.slane %v665, 2
        %v667 = vmax.f32 %v665, %v666
        %v668 = vrot.slane %v667, 1
        %v669 = vmax.f32 %v667, %v668
        %vm670 = vcmask 261254
        %v671 = vsel %vm670, %v569, -inf
        %v672 = vrot.slane %v671, 4
        %v673 = vmax.f32 %v671, %v672
        %v674 = vrot.slane %v673, 2
        %v675 = vmax.f32 %v673, %v674
        %v676 = vrot.slane %v675, 1
        %v677 = vmax.f32 %v675, %v676
        %vm678 = vcmask 261255
        %v679 = vsel %vm678, %v569, -inf
        %vm680 = vcmask 254080
        %v681 = vsel %vm680, %v570, -inf
        %v682 = vmax.f32 %v679, %v681
        %v683 = vrot.slane %v682, 4
        %v684 = vmax.f32 %v682, %v683
        %v685 = vrot.slane %v684, 2
        %v686 = vmax.f32 %v684, %v685
        %v687 = vrot.slane %v686, 1
        %v688 = vmax.f32 %v686, %v687
        %v689 = vsel %vm646, %v570, -inf
        %v690 = vrot.slane %v689, 4
        %v691 = vmax.f32 %v689, %v690
        %v692 = vrot.slane %v691, 2
        %v693 = vmax.f32 %v691, %v692
        %v694 = vrot.slane %v693, 1
        %v695 = vmax.f32 %v693, %v694
        %vm696 = vcmask 257154
        %v697 = vsel %vm696, %v570, -inf
        %v698 = vrot.slane %v697, 4
        %v699 = vmax.f32 %v697, %v698
        %v700 = vrot.slane %v699, 2
        %v701 = vmax.f32 %v699, %v700
        %v702 = vrot.slane %v701, 1
        %v703 = vmax.f32 %v701, %v702
        %705 = vrot.lane.b32.xlu0 %v586, 16
        %v706 = vpop.permute.xlu0 %705
        %709 = vrot.lane.b32.xlu0 %v594, 32
        %v710 = vpop.permute.xlu0 %709
        %713 = vrot.lane.b32.xlu0 %v602, 48
        %v714 = vpop.permute.xlu0 %713
        %717 = vrot.lane.b32.xlu0 %v613, 64
        %v718 = vpop.permute.xlu0 %717
        %721 = vrot.lane.b32.xlu0 %v621, 80
        %v722 = vpop.permute.xlu0 %721
        %725 = vrot.lane.b32.xlu0 %v629, 96
        %v726 = vpop.permute.xlu0 %725
        %729 = vrot.lane.b32.xlu0 %v637, 112
        %v730 = vpop.permute.xlu0 %729
        %733 = vrot.lane.b32.xlu0 %v645, 112
        %v734 = vpop.permute.xlu0 %733
        %737 = vrot.lane.b32.xlu0 %v661, 16
        %v738 = vpop.permute.xlu0 %737
        %741 = vrot.lane.b32.xlu0 %v669, 32
        %v742 = vpop.permute.xlu0 %741
        %745 = vrot.lane.b32.xlu0 %v677, 48
        %v746 = vpop.permute.xlu0 %745
        %749 = vrot.lane.b32.xlu0 %v688, 64
        %v750 = vpop.permute.xlu0 %749
        %753 = vrot.lane.b32.xlu0 %v695, 80
        %v754 = vpop.permute.xlu0 %753
        %757 = vrot.lane.b32.xlu0 %v703, 96
        %v758 = vpop.permute.xlu0 %757
        %vm760 = vcmask 130048
        %v761 = vsel %vm760, %v578, %v706
        %v762 = vsel %vm357, %v761, %v710
        %vm763 = vcmask 392192
        %v764 = vsel %vm763, %v762, %v714
        %v765 = vsel %vm360, %v764, %v718
        %vm766 = vcmask 654336
        %v767 = vsel %vm766, %v765, %v722
        %v768 = vsel %vm363, %v767, %v726
        %vm769 = vcmask 916480
        %v770 = vsel %vm769, %v768, %v730
        %v771 = vsel %vm760, %v734, %v653
        %v772 = vsel %vm357, %v771, %v738
        %v773 = vsel %vm763, %v772, %v742
        %v774 = vsel %vm360, %v773, %v746
        %v775 = vsel %vm766, %v774, %v750
        %v776 = vsel %vm363, %v775, %v754
        %v777 = vsel %vm769, %v776, %v758
        %779 = vrot.lane.b32.xlu0 %v569, 96
        %v780 = vpop.permute.xlu0 %779
        %v782 = vrot.slane %v569, 1
        %783 = vrot.lane.b32.xlu0 %v782, 112
        %v784 = vpop.permute.xlu0 %783
        %v786 = vrot.slane %v569, 2
        %v788 = vrot.slane %v569, 3
        %789 = vrot.lane.b32.xlu0 %v788, 16
        %v790 = vpop.permute.xlu0 %789
        %v792 = vrot.slane %v569, 4
        %793 = vrot.lane.b32.xlu0 %v792, 32
        %v794 = vpop.permute.xlu0 %793
        %v796 = vrot.slane %v569, 5
        %797 = vrot.lane.b32.xlu0 %v796, 48
        %v798 = vpop.permute.xlu0 %797
        %v800 = vrot.slane %v569, 6
        %801 = vrot.lane.b32.xlu0 %v800, 64
        %v802 = vpop.permute.xlu0 %801
        %v804 = vrot.slane %v569, 7
        %805 = vrot.lane.b32.xlu0 %v804, 80
        %v806 = vpop.permute.xlu0 %805
        %v808 = vsel %vm760, %v780, %v784
        %v809 = vsel %vm357, %v808, %v786
        %v810 = vsel %vm763, %v809, %v790
        %v811 = vsel %vm360, %v810, %v794
        %v812 = vsel %vm766, %v811, %v798
        %v813 = vsel %vm363, %v812, %v802
        %v814 = vsel %vm769, %v813, %v806
        %v815 = vld [vmem:[%s3] sm:$0xff]
        %v816 = vld [vmem:[%s3 + $0x8] sm:$0xff]
        %v817 = vld [vmem:[%s3 + $0x10] sm:$0xff]
        %v818 = vld [vmem:[%s3 + $0x18] sm:$0xff]
        %v819 = vld [vmem:[%s3 + $0x20] sm:$0xff]
        %v820 = vld [vmem:[%s3 + $0x28] sm:$0xff]
        %v821 = vld [vmem:[%s3 + $0x30] sm:$0xff]
        %v822 = vld [vmem:[%s3 + $0x38] sm:$0xff]
        %v823 = vld [vmem:[%s3 + $0x40] sm:$0xff]
        %v824 = vld [vmem:[%s3 + $0x48] sm:$0xff]
        %v825 = vld [vmem:[%s3 + $0x50] sm:$0xff]
        %v826 = vld [vmem:[%s3 + $0x58] sm:$0xff]
        %v827 = vld [vmem:[%s3 + $0x60] sm:$0xff]
        %v828 = vld [vmem:[%s3 + $0x68] sm:$0xff]
        %v829 = vld [vmem:[%s3 + $0x70] sm:$0xff]
        %v830 = vld [vmem:[%s3 + $0x78] sm:$0xff]
        %v831 = vld [vmem:[%s3 + $0x80] sm:$0xff]
        %v832 = vld [vmem:[%s3 + $0x88] sm:$0xff]
        %v833 = vld [vmem:[%s3 + $0x90] sm:$0xff]
        %v834 = vld [vmem:[%s3 + $0x98] sm:$0xff]
        %v835 = vld [vmem:[%s3 + $0xa0] sm:$0xff]
        %v836 = vld [vmem:[%s3 + $0xa8] sm:$0xff]
        %v837 = vld [vmem:[%s3 + $0xb0] sm:$0xff]
        %v838 = vld [vmem:[%s3 + $0xb8] sm:$0xff]
        %v839 = vld [vmem:[%s3 + $0xc0] sm:$0xff]
        %v840 = vld [vmem:[%s3 + $0xc8] sm:$0xff]
        %v841 = vld [vmem:[%s3 + $0xd0] sm:$0xff]
        %v842 = vld [vmem:[%s3 + $0xd8] sm:$0xff]
        %v843 = vld [vmem:[%s3 + $0xe0] sm:$0xff]
        %v844 = vld [vmem:[%s3 + $0xe8] sm:$0xff]
        %v845 = vld [vmem:[%s3 + $0xf0] sm:$0xff]
        %v846 = vld [vmem:[%s3 + $0xf8] sm:$0xff]
        %v847 = vld [vmem:[%s3 + $0x100] sm:$0xff]
        %v848 = vld [vmem:[%s3 + $0x108] sm:$0xff]
        %v849 = vld [vmem:[%s3 + $0x110] sm:$0xff]
        %v850 = vld [vmem:[%s3 + $0x118] sm:$0xff]
        %v851 = vld [vmem:[%s3 + $0x120] sm:$0xff]
        %v852 = vld [vmem:[%s3 + $0x128] sm:$0xff]
        %v853 = vld [vmem:[%s3 + $0x130] sm:$0xff]
        %v854 = vld [vmem:[%s3 + $0x138] sm:$0xff]
        %v855 = vld [vmem:[%s3 + $0x140] sm:$0xff]
        %v856 = vld [vmem:[%s3 + $0x148] sm:$0xff]
        %v857 = vld [vmem:[%s3 + $0x150] sm:$0xff]
        %v858 = vld [vmem:[%s3 + $0x158] sm:$0xff]
        %v859 = vld [vmem:[%s3 + $0x160] sm:$0xff]
        %v860 = vld [vmem:[%s3 + $0x168] sm:$0xff]
        %v861 = vld [vmem:[%s3 + $0x170] sm:$0xff]
        %v862 = vld [vmem:[%s3 + $0x178] sm:$0xff]
        %v863 = vld [vmem:[%s4] sm:$0x1]
        %864 = vmatprep.subr.mxu0 0.0
        %865 = vmatpush1.msra.mxu0 %v815
        %866 = vmatprep.subr.mxu0 0.0
        %867 = vmatpush1.msra.mxu0 %v816
        %868 = vmatprep.subr.mxu0 0.0
        %869 = vmatpush1.msra.mxu0 %v817
        %870 = vmatprep.subr.mxu0 0.0
        %871 = vmatpush1.msra.mxu0 %v818
        %872 = vmatprep.subr.mxu0 0.0
        %873 = vmatpush1.msra.mxu0 %v819
        %874 = vmatprep.subr.mxu0 0.0
        %875 = vmatpush1.msra.mxu0 %v820
        %876 = vmatprep.subr.mxu0 0.0
        %877 = vmatpush1.msra.mxu0 %v821
        %878 = vmatprep.subr.mxu0 0.0
        %879 = vmatpush1.msra.mxu0 %v822
        %880 = vmatprep.subr.mxu0 0.0
        %881 = vmatpush1.msra.mxu0 %v823
        %882 = vmatprep.subr.mxu0 0.0
        %883 = vmatpush1.msra.mxu0 %v824
        %884 = vmatprep.subr.mxu0 0.0
        %885 = vmatpush1.msra.mxu0 %v825
        %886 = vmatprep.subr.mxu0 0.0
        %887 = vmatpush1.msra.mxu0 %v826
        %888 = vmatprep.subr.mxu0 0.0
        %889 = vmatpush1.msra.mxu0 %v827
        %890 = vmatprep.subr.mxu0 0.0
        %891 = vmatpush1.msra.mxu0 %v828
        %892 = vmatprep.subr.mxu0 0.0
        %893 = vmatpush1.msra.mxu0 %v829
        %894 = vmatprep.subr.mxu0 0.0
        %895 = vmatpush1.msra.mxu0 %v830
        %896 = vmatprep.subr.mxu0 0.0
        %897 = vmatpush1.msra.mxu0 %v831
        %898 = vmatprep.subr.mxu0 0.0
        %899 = vmatpush1.msra.mxu0 %v832
        %900 = vmatprep.subr.mxu0 0.0
        %901 = vmatpush1.msra.mxu0 %v833
        %902 = vmatprep.subr.mxu0 0.0
        %903 = vmatpush1.msra.mxu0 %v834
        %904 = vmatprep.subr.mxu0 0.0
        %905 = vmatpush1.msra.mxu0 %v835
        %906 = vmatprep.subr.mxu0 0.0
        %907 = vmatpush1.msra.mxu0 %v836
        %908 = vmatprep.subr.mxu0 0.0
        %909 = vmatpush1.msra.mxu0 %v837
        %910 = vmatprep.subr.mxu0 0.0
        %911 = vmatpush1.msra.mxu0 %v838
        %912 = vmatprep.subr.mxu0 0.0
        %913 = vmatpush1.msra.mxu0 %v839
        %914 = vmatprep.subr.mxu0 0.0
        %915 = vmatpush1.msra.mxu0 %v840
        %916 = vmatprep.subr.mxu0 0.0
        %917 = vmatpush1.msra.mxu0 %v841
        %918 = vmatprep.subr.mxu0 0.0
        %919 = vmatpush1.msra.mxu0 %v842
        %920 = vmatprep.subr.mxu0 0.0
        %921 = vmatpush1.msra.mxu0 %v843
        %922 = vmatprep.subr.mxu0 0.0
        %923 = vmatpush1.msra.mxu0 %v844
        %924 = vmatprep.subr.mxu0 0.0
        %925 = vmatpush1.msra.mxu0 %v845
        %926 = vmatprep.subr.mxu0 0.0
        %927 = vmatpush1.msra.mxu0 %v846
        %928 = vmatprep.mubr.f32.mxu0 %v777
        %929 = vmatmul.mubr.f32.gmra.mrb[0].mxu0 %v770
        %v930 = vpop.f32.mrb[0].mxu0
        %v931 = vadd.f32 %v863, %v930
        %v932 = vpop.f32.mrb[0].mxu0
        %933 = vdwg.mxu0
        %934 = vmatprep.subr.mxu0 0.0
        %935 = vmatpush1.msra.mxu0 %v847
        %936 = vmatprep.subr.mxu0 0.0
        %937 = vmatpush1.msra.mxu0 %v848
        %938 = vmatprep.subr.mxu0 0.0
        %939 = vmatpush1.msra.mxu0 %v849
        %940 = vmatprep.subr.mxu0 0.0
        %941 = vmatpush1.msra.mxu0 %v850
        %942 = vmatprep.subr.mxu0 0.0
        %943 = vmatpush1.msra.mxu0 %v851
        %944 = vmatprep.subr.mxu0 0.0
        %945 = vmatpush1.msra.mxu0 %v852
        %946 = vmatprep.subr.mxu0 0.0
        %947 = vmatpush1.msra.mxu0 %v853
        %948 = vmatprep.subr.mxu0 0.0
        %949 = vmatpush1.msra.mxu0 %v854
        %950 = vmatprep.subr.mxu0 0.0
        %951 = vmatpush1.msra.mxu0 %v855
        %952 = vmatprep.subr.mxu0 0.0
        %953 = vmatpush1.msra.mxu0 %v856
        %954 = vmatprep.subr.mxu0 0.0
        %955 = vmatpush1.msra.mxu0 %v857
        %956 = vmatprep.subr.mxu0 0.0
        %957 = vmatpush1.msra.mxu0 %v858
        %958 = vmatprep.subr.mxu0 0.0
        %959 = vmatpush1.msra.mxu0 %v859
        %960 = vmatprep.subr.mxu0 0.0
        %961 = vmatpush1.msra.mxu0 %v860
        %962 = vmatprep.subr.mxu0 0.0
        %963 = vmatpush1.msra.mxu0 %v861
        %964 = vmatprep.subr.mxu0 0.0
        %965 = vmatpush1.msra.mxu0 %v862
        %966 = vmatprep.subr.mxu0 0.0
        %967 = vmatpush1.msra.mxu0 0.0
        %968 = vmatprep.subr.mxu0 0.0
        %969 = vmatpush1.msra.mxu0 0.0
        %970 = vmatprep.subr.mxu0 0.0
        %971 = vmatpush1.msra.mxu0 0.0
        %972 = vmatprep.subr.mxu0 0.0
        %973 = vmatpush1.msra.mxu0 0.0
        %974 = vmatprep.subr.mxu0 0.0
        %975 = vmatpush1.msra.mxu0 0.0
        %976 = vmatprep.subr.mxu0 0.0
        %977 = vmatpush1.msra.mxu0 0.0
        %978 = vmatprep.subr.mxu0 0.0
        %979 = vmatpush1.msra.mxu0 0.0
        %980 = vmatprep.subr.mxu0 0.0
        %981 = vmatpush1.msra.mxu0 0.0
        %982 = vmatprep.subr.mxu0 0.0
        %983 = vmatpush1.msra.mxu0 0.0
        %984 = vmatprep.subr.mxu0 0.0
        %985 = vmatpush1.msra.mxu0 0.0
        %986 = vmatprep.subr.mxu0 0.0
        %987 = vmatpush1.msra.mxu0 0.0
        %988 = vmatprep.subr.mxu0 0.0
        %989 = vmatpush1.msra.mxu0 0.0
        %990 = vmatprep.subr.mxu0 0.0
        %991 = vmatpush1.msra.mxu0 0.0
        %992 = vmatprep.subr.mxu0 0.0
        %993 = vmatpush1.msra.mxu0 0.0
        %994 = vmatprep.subr.mxu0 0.0
        %995 = vmatpush1.msra.mxu0 0.0
        %996 = vmatprep.subr.mxu0 0.0
        %997 = vmatpush1.msra.mxu0 0.0
        %998 = vmatprep.mubr.f32.mxu0 0.0
        %999 = vmatmul.mubr.f32.gmra.mrb[0].mxu0 %v814
        %v1000 = vpop.f32.mrb[0].mxu0
        %v1001 = vadd.f32 %v931, %v1000
        %v1002 = vpop.f32.mrb[0].mxu0
        %1003 = vdwg.mxu0
        %v1004 = vmax.f32 %v1001, 0.0
        %v1005 = vld [vmem:[%s5] sm:$0xff]
        %v1006 = vld [vmem:[%s5 + $0x8] sm:$0xff]
        %v1007 = vld [vmem:[%s5 + $0x10] sm:$0xff]
        %v1008 = vld [vmem:[%s5 + $0x18] sm:$0xff]
        %v1009 = vld [vmem:[%s6] sm:$0x1]
        %v1011 = vsel %vm357, %v1004, 0
        %1013 = vmatprep.subr.mxu0 0.0
        %1014 = vmatpush1.msra.mxu0 %v1005
        %1015 = vmatprep.subr.mxu0 0.0
        %1016 = vmatpush1.msra.mxu0 %v1006
        %1017 = vmatprep.subr.mxu0 0.0
        %1018 = vmatpush1.msra.mxu0 %v1007
        %1019 = vmatprep.subr.mxu0 0.0
        %1020 = vmatpush1.msra.mxu0 %v1008
        %1021 = vmatprep.subr.mxu0 0.0
        %1022 = vmatpush1.msra.mxu0 0.0
        %1023 = vmatprep.subr.mxu0 0.0
        %1024 = vmatpush1.msra.mxu0 0.0
        %1025 = vmatprep.subr.mxu0 0.0
        %1026 = vmatpush1.msra.mxu0 0.0
        %1027 = vmatprep.subr.mxu0 0.0
        %1028 = vmatpush1.msra.mxu0 0.0
        %1029 = vmatprep.subr.mxu0 0.0
        %1030 = vmatpush1.msra.mxu0 0.0
        %1031 = vmatprep.subr.mxu0 0.0
        %1032 = vmatpush1.msra.mxu0 0.0
        %1033 = vmatprep.subr.mxu0 0.0
        %1034 = vmatpush1.msra.mxu0 0.0
        %1035 = vmatprep.subr.mxu0 0.0
        %1036 = vmatpush1.msra.mxu0 0.0
        %1037 = vmatprep.subr.mxu0 0.0
        %1038 = vmatpush1.msra.mxu0 0.0
        %1039 = vmatprep.subr.mxu0 0.0
        %1040 = vmatpush1.msra.mxu0 0.0
        %1041 = vmatprep.subr.mxu0 0.0
        %1042 = vmatpush1.msra.mxu0 0.0
        %1043 = vmatprep.subr.mxu0 0.0
        %1044 = vmatpush1.msra.mxu0 0.0
        %1045 = vmatprep.subr.mxu0 0.0
        %1046 = vmatpush1.msra.mxu0 0.0
        %1047 = vmatprep.subr.mxu0 0.0
        %1048 = vmatpush1.msra.mxu0 0.0
        %1049 = vmatprep.subr.mxu0 0.0
        %1050 = vmatpush1.msra.mxu0 0.0
        %1051 = vmatprep.subr.mxu0 0.0
        %1052 = vmatpush1.msra.mxu0 0.0
        %1053 = vmatprep.subr.mxu0 0.0
        %1054 = vmatpush1.msra.mxu0 0.0
        %1055 = vmatprep.subr.mxu0 0.0
        %1056 = vmatpush1.msra.mxu0 0.0
        %1057 = vmatprep.subr.mxu0 0.0
        %1058 = vmatpush1.msra.mxu0 0.0
        %1059 = vmatprep.subr.mxu0 0.0
        %1060 = vmatpush1.msra.mxu0 0.0
        %1061 = vmatprep.subr.mxu0 0.0
        %1062 = vmatpush1.msra.mxu0 0.0
        %1063 = vmatprep.subr.mxu0 0.0
        %1064 = vmatpush1.msra.mxu0 0.0
        %1065 = vmatprep.subr.mxu0 0.0
        %1066 = vmatpush1.msra.mxu0 0.0
        %1067 = vmatprep.subr.mxu0 0.0
        %1068 = vmatpush1.msra.mxu0 0.0
        %1069 = vmatprep.subr.mxu0 0.0
        %1070 = vmatpush1.msra.mxu0 0.0
        %1071 = vmatprep.subr.mxu0 0.0
        %1072 = vmatpush1.msra.mxu0 0.0
        %1073 = vmatprep.subr.mxu0 0.0
        %1074 = vmatpush1.msra.mxu0 0.0
        %1075 = vmatprep.subr.mxu0 0.0
        %1076 = vmatpush1.msra.mxu0 0.0
        %1077 = vmatprep.mubr.f32.mxu0 0.0
        %1078 = vmatmul.mubr.f32.gmra.mrb[0].mxu0 %v1011
        %v1079 = vpop.f32.mrb[0].mxu0
        %v1080 = vadd.f32 %v1009, %v1079
        %v1081 = vpop.f32.mrb[0].mxu0
        %1082 = vdwg.mxu0
        %vm1083 = vcmask 57344
        %1084 = vst.msk [vmem:[%s270] sm:$0x1] %vm1083, %v1080
        %s1085 = sand.u32 %s181, 1
        %s1086 = scalar_lea.sflag [#allocation3], %s1085
        %s1087 = sand.u32 %s181, 1
        %s1088 = scalar_lea.vmem [#allocation2], %s1087
        // Predicated region
        $region49: #{forward.1} parent=47 // pred_check
          %p1089 = pneg %p191
        $region50: #{forward.1} parent=47 // pred_check_branch
          %1091 = sbr.rel (%p1089) target = $region52
        $region51: #{forward.1} parent=47 // pred_region
          %s1093 = ssub.s32 16, 16
          %1094 = vsyncadd %s1086, %s1093
          %s1095 = smul.addr %s21, 16
          %s1096 = scalar_lea.hbm %s7, %s1095
          %s1098 = sshll.u32 %s1088, 4
          %s1099 = int_to_ptr.vmem [resolvable:$true] %s1098
          %1101 = dma.vmem_to_hbm [thread:$0]  %s1099, 16, %s1096, %s1086
        $region52: #{forward.1} parent=47 // pred_fallthru
          _
      $region48: #{forward.1} parent=5 // pred_fallthru
        _
      %p1102 = scmp.le.s32.totalorder 2, %s16
      // Predicated region
      $region53: #{forward.1} parent=5 // pred_check
        %p1103 = pneg %p1102
      $region54: #{forward.1} parent=5 // pred_check_branch
        %1105 = sbr.rel (%p1103) target = $region56
      $region55: #{forward.1} parent=5 // pred_region
        %s1106 = ssub.s32 %s16, 2
        // Predicated region
        $region57: #{forward.1} parent=55 // pred_check
          %p1107 = pneg %p197
        $region58: #{forward.1} parent=55 // pred_check_branch
          %1109 = sbr.rel (%p1107) target = $region60
        $region59: #{forward.1} parent=55 // pred_region
          %s1110 = sand.u32 %s182, 1
          %s1111 = scalar_lea.sflag [#allocation3], %s1110
          %s1112 = sand.u32 %s182, 1
          %s1113 = scalar_lea.vmem [#allocation2], %s1112
          %1114 = dma.done %s1111, 16
        $region60: #{forward.1} parent=55 // pred_fallthru
          _
      $region56: #{forward.1} parent=5 // pred_fallthru
        _
    $region6: #{forward.1} parent=1 // loop_footer
      %s20 = sadd.s32 1, %s16
    $region7: #{forward.1} parent=1 // loop_footer_branch
      %15 = sbr.rel target = $region3
    $region8: #{forward.1} parent=1 // loop_exit
      _
    %1115 = vsyncpa [#allocation3], 1
    %s1116 = scalar_lea.sflag [#allocation3], 1
    %1117 = vsyncpa %s1116, 1

</llo_original>
